<compile_context>
chip_gen: v5e
topology: v5e:2x2
jax: 0.10.0
libtpu: 0.0.40
codegen_flags: <defaults>
</compile_context>

<pallas_src>
import functools

import jax
import jax.numpy as jnp
from jax.experimental import pallas as pl
from jax.experimental.pallas import tpu as pltpu

NEG_SLOPE = 0.01  # PyTorch nn.LeakyReLU default


def fc_l2_kernel(x_ref, w1_ref, b1_ref, w2_ref, b2_ref, o_ref):
    # x: [TB, fcdim1]                         (stored dtype of the caller's x)
    # w1: [fcdim1, fcdim2], b1: [1, fcdim2]   (bias kept f32)
    # w2: [fcdim2, num_classes], b2: [1, num_classes] (bias kept f32)
    # In-kernel cast to the weight compute dtype (no-op if already equal);
    # hidden under the x DMA, avoids an extra wrapper-side pass over x.
    x = x_ref[...].astype(w1_ref.dtype)
    h = jnp.dot(x, w1_ref[...], preferred_element_type=jnp.float32) + b1_ref[...]
    # LeakyReLU(0.01): identical to where(h>0, h, 0.01h) for slope<1, one op less.
    h = jnp.maximum(h, NEG_SLOPE * h)
    # Dropout: identity in eval mode.
    out = jnp.dot(h.astype(w2_ref.dtype), w2_ref[...],
                  preferred_element_type=jnp.float32) + b2_ref[...]
    o_ref[...] = out.astype(o_ref.dtype)


def prepare_params(w1, b1, w2, b2, compute_dtype=jnp.bfloat16):
    """One-time parameter prep (outside the hot path).

    PyTorch Linear layout [out, in] -> [in, out]; biases -> [1, N] float32;
    weights cast to the compute dtype (bf16 default: MXU fast path + fewer
    HBM/VMEM bytes; pass jnp.float32 for an exact path)."""
    w1_t = jnp.asarray(w1).T.astype(compute_dtype)        # [fcdim1, fcdim2]
    w2_t = jnp.asarray(w2).T.astype(compute_dtype)        # [fcdim3, num_classes]
    b1_2d = jnp.asarray(b1, jnp.float32).reshape(1, -1)   # [1, fcdim2]
    b2_2d = jnp.asarray(b2, jnp.float32).reshape(1, -1)   # [1, num_classes]
    return w1_t, b1_2d, w2_t, b2_2d


def _round_up(v, m):
    return ((v + m - 1) // m) * m


def _lanes(n):
    return _round_up(n, 128)


@functools.partial(jax.jit, static_argnames=("tile_b",))
def fc_l2_forward(x, w1_t, b1_2d, w2_t, b2_2d, *, tile_b=4096):
    """x: [B, fcdim1]; params from prepare_params (pre-transposed, [in, out])."""
    B, fcdim1 = x.shape
    fcdim2 = w1_t.shape[1]
    num_classes = w2_t.shape[1]
    out_dtype = x.dtype

    x_item = jnp.dtype(x.dtype).itemsize
    w_item = jnp.dtype(w1_t.dtype).itemsize
    o_item = jnp.dtype(out_dtype).itemsize

    # Batch tile: dtype-native sublane multiple (16 for bf16, 8 for f32), sized
    # so there are >= 2 grid steps when B allows (keeps both v7x TCs busy),
    # capped at tile_b. No padding of x: the last block may be ragged.
    sub = 16 if (x_item == 2 or w_item == 2) else 8
    tb = min(int(tile_b), _round_up(max(pl.cdiv(B, 2), 1), sub))
    tb = max(sub, _round_up(tb, sub))
    grid = (pl.cdiv(B, tb),)

    # VMEM budget for the chosen tile (lane-padded to 128), with margin.
    vmem_needed = (
        2 * tb * _lanes(fcdim1) * x_item            # x double buffers
        + 2 * tb * _lanes(num_classes) * o_item     # out double buffers
        + tb * _lanes(fcdim2) * 4                   # f32 h intermediate
        + tb * _lanes(fcdim1) * w_item              # in-kernel cast copy of x
        + (fcdim1 * _lanes(fcdim2) + fcdim2 * _lanes(num_classes)) * w_item
        + (_lanes(fcdim2) + _lanes(num_classes)) * 4
    )
    vmem_limit = int(min(64 * 1024 * 1024,
                         max(16 * 1024 * 1024, int(1.5 * vmem_needed))))

    flops = 2 * B * (fcdim1 * fcdim2 + fcdim2 * num_classes)
    bytes_accessed = int(
        B * fcdim1 * x_item                          # x read (single pass)
        + B * num_classes * o_item                   # out write
        + (fcdim1 * fcdim2 + fcdim2 * num_classes) * w_item  # weights (resident)
        + (fcdim2 + num_classes) * 4                 # biases (f32)
    )

    return pl.pallas_call(
        fc_l2_kernel,
        out_shape=jax.ShapeDtypeStruct((B, num_classes), out_dtype),
        grid=grid,
        in_specs=[
            pl.BlockSpec((tb, fcdim1), lambda i: (i, 0)),           # x: batch-tiled
            pl.BlockSpec((fcdim1, fcdim2), lambda i: (0, 0)),       # w1: resident
            pl.BlockSpec((1, fcdim2), lambda i: (0, 0)),            # b1: resident
            pl.BlockSpec((fcdim2, num_classes), lambda i: (0, 0)),  # w2: resident
            pl.BlockSpec((1, num_classes), lambda i: (0, 0)),       # b2: resident
        ],
        out_specs=pl.BlockSpec((tb, num_classes), lambda i: (i, 0)),
        compiler_params=pltpu.CompilerParams(
            dimension_semantics=("parallel",),   # shard batch across TCs on v7x
            vmem_limit_bytes=vmem_limit,
        ),
        cost_estimate=pl.CostEstimate(
            flops=flops, transcendentals=0, bytes_accessed=bytes_accessed),
    )(x, w1_t, b1_2d, w2_t, b2_2d)


def reference_forward(x, w1, b1, w2, b2):
    h = x.astype(jnp.float32) @ w1.T.astype(jnp.float32) + b1
    h = jnp.where(h > 0, h, NEG_SLOPE * h)
    return h @ w2.T.astype(jnp.float32) + b2


if __name__ == "__main__":
    # Shapes consistent with the module: fcdim1=32, fcdim2=fcdim3=64, num_classes=8.
    fcdim1, fcdim2, num_classes = 32, 64, 8
    fcdim3 = fcdim2  # required for the nn.Sequential to be consistent

    key = jax.random.PRNGKey(0)
    kx, k1, k2, k3, k4 = jax.random.split(key, 5)

    # PyTorch Linear weight layout: [out, in].
    w1 = jax.random.normal(k1, (fcdim2, fcdim1), jnp.float32) * (1.0 / jnp.sqrt(fcdim1))
    b1 = jax.random.normal(k2, (fcdim2,), jnp.float32) * 0.01
    w2 = jax.random.normal(k3, (num_classes, fcdim3), jnp.float32) * (1.0 / jnp.sqrt(fcdim3))
    b2 = jax.random.normal(k4, (num_classes,), jnp.float32) * 0.01

    # 1) f32 exact path, small batch (single-block grid).
    x8 = jax.random.normal(kx, (8, fcdim1), jnp.float32)
    params_f32 = prepare_params(w1, b1, w2, b2, jnp.float32)
    out8 = jax.block_until_ready(fc_l2_forward(x8, *params_f32))
    ref8 = reference_forward(x8, w1, b1, w2, b2)
    assert out8.shape == (8, num_classes)
    assert jnp.allclose(out8, ref8, atol=1e-4, rtol=1e-4), "f32 single-block mismatch"

    # 2) f32 path, ragged multi-block grid (B=100, tb=32 -> 4 steps, partial tail).
    x100 = jax.random.normal(kx, (100, fcdim1), jnp.float32)
    out100 = jax.block_until_ready(fc_l2_forward(x100, *params_f32, tile_b=32))
    ref100 = reference_forward(x100, w1, b1, w2, b2)
    assert out100.shape == (100, num_classes)
    assert jnp.allclose(out100, ref100, atol=1e-4, rtol=1e-4), "f32 ragged-grid mismatch"

    # 3) bf16 weights (default prepare_params), f32 x cast in-kernel; f32 acc.
    params_bf16 = prepare_params(w1, b1, w2, b2)  # bf16 default
    x64 = jax.random.normal(kx, (64, fcdim1), jnp.float32)
    ref64 = reference_forward(x64, w1, b1, w2, b2)
    out_bf = jax.block_until_ready(fc_l2_forward(x64, *params_bf16, tile_b=32))
    assert out_bf.shape == (64, num_classes)
    assert jnp.allclose(out_bf.astype(jnp.float32), ref64, atol=1e-1, rtol=1e-1), \
        "bf16-weight path mismatch"

    # 4) bf16 x + bf16 weights (halves the dominant HBM read stream).
    out_bfx = jax.block_until_ready(
        fc_l2_forward(x64.astype(jnp.bfloat16), *params_bf16, tile_b=32))
    assert out_bfx.shape == (64, num_classes)
    assert jnp.allclose(out_bfx.astype(jnp.float32), ref64, atol=1e-1, rtol=1e-1), \
        "bf16-x path mismatch"

    print("KERNEL_OK")
</pallas_src>

<mosaic_0001>
module attributes {stable_mosaic.version = 11 : i64} {
  func.func @fc_l2_kernel(%arg0: i32, %arg1: memref<8x32xf32, #tpu.memory_space<vmem>>, %arg2: memref<32x64xf32, #tpu.memory_space<vmem>>, %arg3: memref<1x64xf32, #tpu.memory_space<vmem>>, %arg4: memref<64x8xf32, #tpu.memory_space<vmem>>, %arg5: memref<1x8xf32, #tpu.memory_space<vmem>>, %arg6: memref<8x8xf32, #tpu.memory_space<vmem>>) attributes {dimension_semantics = [#tpu.dimension_semantics<parallel>], iteration_bounds = array<i64: 1>, scalar_prefetch = 0 : i64, scratch_operands = 0 : i64, tpu.core_type = #tpu.core_type<tc>, window_params = [{transform_indices = @transform_0, window_bounds = array<i64: 8, 32>}, {pipeline_mode = #tpu.pipeline_mode<synchronous>, transform_indices = @transform_1, window_bounds = array<i64: 32, 64>}, {pipeline_mode = #tpu.pipeline_mode<synchronous>, transform_indices = @transform_2, window_bounds = array<i64: 1, 64>}, {pipeline_mode = #tpu.pipeline_mode<synchronous>, transform_indices = @transform_3, window_bounds = array<i64: 64, 8>}, {pipeline_mode = #tpu.pipeline_mode<synchronous>, transform_indices = @transform_4, window_bounds = array<i64: 1, 8>}, {transform_indices = @transform_5, window_bounds = array<i64: 8, 8>}]} {
    %c0 = arith.constant 0 : index
    %c0_0 = arith.constant 0 : index
    %0 = vector.load %arg1[%c0, %c0_0] : memref<8x32xf32, #tpu.memory_space<vmem>>, vector<8x32xf32>
    %c0_1 = arith.constant 0 : index
    %c0_2 = arith.constant 0 : index
    %1 = vector.load %arg2[%c0_1, %c0_2] : memref<32x64xf32, #tpu.memory_space<vmem>>, vector<32x64xf32>
    %cst = arith.constant dense<0.000000e+00> : vector<8x64xf32>
    %2 = tpu.matmul %0, %1, %cst {dimension_numbers = #tpu.dot_dimension_numbers<[1], [0], [0], [1], [0, 0, 1, 1], [], []>} : vector<8x32xf32>, vector<32x64xf32>, vector<8x64xf32> -> vector<8x64xf32>
    %c0_3 = arith.constant 0 : index
    %c0_4 = arith.constant 0 : index
    %3 = vector.load %arg3[%c0_3, %c0_4] : memref<1x64xf32, #tpu.memory_space<vmem>>, vector<1x64xf32>
    %4 = vector.broadcast %3 : vector<1x64xf32> to vector<8x64xf32>
    %5 = arith.addf %2, %4 : vector<8x64xf32>
    %cst_5 = arith.constant 0.00999999977 : f32
    %6 = vector.broadcast %cst_5 : f32 to vector<8x64xf32>
    %7 = arith.mulf %6, %5 : vector<8x64xf32>
    %8 = arith.maximumf %5, %7 : vector<8x64xf32>
    %c0_6 = arith.constant 0 : index
    %c0_7 = arith.constant 0 : index
    %9 = vector.load %arg4[%c0_6, %c0_7] : memref<64x8xf32, #tpu.memory_space<vmem>>, vector<64x8xf32>
    %cst_8 = arith.constant dense<0.000000e+00> : vector<8x8xf32>
    %10 = tpu.matmul %8, %9, %cst_8 {dimension_numbers = #tpu.dot_dimension_numbers<[1], [0], [0], [1], [0, 0, 1, 1], [], []>} : vector<8x64xf32>, vector<64x8xf32>, vector<8x8xf32> -> vector<8x8xf32>
    %c0_9 = arith.constant 0 : index
    %c0_10 = arith.constant 0 : index
    %11 = vector.load %arg5[%c0_9, %c0_10] : memref<1x8xf32, #tpu.memory_space<vmem>>, vector<1x8xf32>
    %12 = vector.broadcast %11 : vector<1x8xf32> to vector<8x8xf32>
    %13 = arith.addf %10, %12 : vector<8x8xf32>
    %c0_11 = arith.constant 0 : index
    %c0_12 = arith.constant 0 : index
    %14 = vector.load %arg6[%c0_11, %c0_12] : memref<8x8xf32, #tpu.memory_space<vmem>>, vector<8x8xf32>
    tpu.vector_store %arg6[%c0_11, %c0_12], %13 {strides = array<i32>} : memref<8x8xf32, #tpu.memory_space<vmem>>, vector<8x8xf32>,
    return
  }
  func.func @transform_0(%arg0: i32) -> (i32, i32) {
    %c0_i32 = arith.constant 0 : i32
    %c0_i32_0 = arith.constant 0 : i32
    return %arg0, %c0_i32 : i32, i32
  }
  func.func @transform_1(%arg0: i32) -> (i32, i32) {
    %c0_i32 = arith.constant 0 : i32
    %c0_i32_0 = arith.constant 0 : i32
    %c0_i32_1 = arith.constant 0 : i32
    return %c0_i32, %c0_i32_0 : i32, i32
  }
  func.func @transform_2(%arg0: i32) -> (i32, i32) {
    %c0_i32 = arith.constant 0 : i32
    %c0_i32_0 = arith.constant 0 : i32
    %c0_i32_1 = arith.constant 0 : i32
    return %c0_i32, %c0_i32_0 : i32, i32
  }
  func.func @transform_3(%arg0: i32) -> (i32, i32) {
    %c0_i32 = arith.constant 0 : i32
    %c0_i32_0 = arith.constant 0 : i32
    %c0_i32_1 = arith.constant 0 : i32
    return %c0_i32, %c0_i32_0 : i32, i32
  }
  func.func @transform_4(%arg0: i32) -> (i32, i32) {
    %c0_i32 = arith.constant 0 : i32
    %c0_i32_0 = arith.constant 0 : i32
    %c0_i32_1 = arith.constant 0 : i32
    return %c0_i32, %c0_i32_0 : i32, i32
  }
  func.func @transform_5(%arg0: i32) -> (i32, i32) {
    %c0_i32 = arith.constant 0 : i32
    %c0_i32_0 = arith.constant 0 : i32
    return %arg0, %c0_i32 : i32, i32
  }
}

</mosaic_0001>

<llo_original>
// kernel: fc_l2_forward.1
$region0: #{fc_l2_forward.1}
  #allocation0 [shape = 'u32[]', space=smem, size = 0x4, offset = 0x4, fixed_abs, tag = 'smem constant byte address 0x4 - core index']
  #allocation1 [shape = 'u32[72,128]{1,0:T(1,128)}', space=vmem, size = 0x9000, scoped, tag = 'internal scratch']
  %s0 = inlined_call_operand.vmem [shape: f32[8,32], index: 0, kind: input, shape index: {}]
  %s1 = inlined_call_operand.vmem [shape: f32[32,64], index: 1, kind: input, shape index: {}]
  %s2 = inlined_call_operand.vmem [shape: f32[1,64], index: 2, kind: input, shape index: {}]
  %s3 = inlined_call_operand.vmem [shape: f32[64,8], index: 3, kind: input, shape index: {}]
  %s4 = inlined_call_operand.vmem [shape: f32[1,8], index: 4, kind: input, shape index: {}]
  %s5 = inlined_call_operand.hbm [shape: f32[8,8], index: 5, kind: output, shape index: {}]
  %s6 = sld [smem:[#allocation0]]
  $region30: #{fc_l2_forward.1} parent=0
    _
  %s8 = ssub.s32 1, %s6
  %s9 = scalar_select 0, %s8, %s6
  $region1: #{fc_l2_forward.1} parent=0
    #allocation2 [shape = 'u8[4096]{0}', space=vmem, size = 0x1000, scoped, tag = 'output window, operand 0, single buffered']
    #allocation3 [shape = 's32[1]{0}', space=sflag, size = 0x4, scoped, tag = 'scoped memory for fc_l2_forward.1']
    %10 = vsyncpa [#allocation3], 0
    // Predicated region
    $region2: #{fc_l2_forward.1} parent=1 // pred_check
      _
    $region3: #{fc_l2_forward.1} parent=1 // pred_check_branch
      %12 = sbr.rel (0) target = $region5
    $region4: #{fc_l2_forward.1} parent=1 // pred_region
      _
    $region5: #{fc_l2_forward.1} parent=1 // pred_fallthru
      _
    // Predicated region
    $region6: #{fc_l2_forward.1} parent=1 // pred_check
      _
    $region7: #{fc_l2_forward.1} parent=1 // pred_check_branch
      %14 = sbr.rel (0) target = $region9
    $region8: #{fc_l2_forward.1} parent=1 // pred_region
      _
    $region9: #{fc_l2_forward.1} parent=1 // pred_fallthru
      _
    // Predicated region
    $region10: #{fc_l2_forward.1} parent=1 // pred_check
      _
    $region11: #{fc_l2_forward.1} parent=1 // pred_check_branch
      %16 = sbr.rel (0) target = $region13
    $region12: #{fc_l2_forward.1} parent=1 // pred_region
      _
    $region13: #{fc_l2_forward.1} parent=1 // pred_fallthru
      _
    // Predicated region
    $region14: #{fc_l2_forward.1} parent=1 // pred_check
      _
    $region15: #{fc_l2_forward.1} parent=1 // pred_check_branch
      %18 = sbr.rel (0) target = $region17
    $region16: #{fc_l2_forward.1} parent=1 // pred_region
      _
    $region17: #{fc_l2_forward.1} parent=1 // pred_fallthru
      _
    // Predicated region
    $region18: #{fc_l2_forward.1} parent=1 // pred_check
      _
    $region19: #{fc_l2_forward.1} parent=1 // pred_check_branch
      %20 = sbr.rel (0) target = $region21
    $region20: #{fc_l2_forward.1} parent=1 // pred_region
      _
    $region21: #{fc_l2_forward.1} parent=1 // pred_fallthru
      _
    %v21 = vld [vmem:[%s0] sm:$0xff]
    %v22 = vld [vmem:[%s1] sm:$0xff]
    %v23 = vld [vmem:[%s1 + $0x8] sm:$0xff]
    %v24 = vld [vmem:[%s1 + $0x10] sm:$0xff]
    %v25 = vld [vmem:[%s1 + $0x18] sm:$0xff]
    %v26 = vld [vmem:[%s2] sm:$0x1]
    %v28 = vperm.slane %v26, 0
    %vm30 = vcmask 261120
    %v32 = vsel %vm30, %v21, 0
    %34 = vmatpush.msra.mxu0 0.0
    %35 = vmatpush.msra.mxu0 0.0
    %36 = vmatpush.msra.mxu0 0.0
    %37 = vmatpush.msra.mxu0 0.0
    %38 = vmatpush.msra.mxu0 0.0
    %39 = vmatpush.msra.mxu0 0.0
    %40 = vmatpush.msra.mxu0 0.0
    %41 = vmatpush.msra.mxu0 0.0
    %42 = vmatpush.msra.mxu0 0.0
    %43 = vmatpush.msra.mxu0 0.0
    %44 = vmatpush.msra.mxu0 0.0
    %45 = vmatpush.msra.mxu0 0.0
    %46 = vmatpush.msra.mxu0 %v25
    %47 = vmatpush.msra.mxu0 %v24
    %48 = vmatpush.msra.mxu0 %v23
    %49 = vmatpush.msra.mxu0 %v22
    %50 = vmatmul.f32.gmra.mxu0 %v32
    %v51 = vpop.f32.mrf.mxu0
    %v52 = vadd.f32 %v28, %v51
    %53 = vdwg.mxu0
    %v54 = vmul.f32 %v52, 0.01
    %v55 = vmax.f32 %v52, %v54
    %v56 = vld [vmem:[%s3] sm:$0xff]
    %v57 = vld [vmem:[%s3 + $0x8] sm:$0xff]
    %v58 = vld [vmem:[%s3 + $0x10] sm:$0xff]
    %v59 = vld [vmem:[%s3 + $0x18] sm:$0xff]
    %v60 = vld [vmem:[%s3 + $0x20] sm:$0xff]
    %v61 = vld [vmem:[%s3 + $0x28] sm:$0xff]
    %v62 = vld [vmem:[%s3 + $0x30] sm:$0xff]
    %v63 = vld [vmem:[%s3 + $0x38] sm:$0xff]
    %v64 = vld [vmem:[%s4] sm:$0x1]
    %v66 = vperm.slane %v64, 0
    %vm68 = vcmask 523264
    %v70 = vsel %vm68, %v55, 0
    %72 = vmatpush.msra.mxu0 0.0
    %73 = vmatpush.msra.mxu0 0.0
    %74 = vmatpush.msra.mxu0 0.0
    %75 = vmatpush.msra.mxu0 0.0
    %76 = vmatpush.msra.mxu0 0.0
    %77 = vmatpush.msra.mxu0 0.0
    %78 = vmatpush.msra.mxu0 0.0
    %79 = vmatpush.msra.mxu0 0.0
    %80 = vmatpush.msra.mxu0 %v63
    %81 = vmatpush.msra.mxu0 %v62
    %82 = vmatpush.msra.mxu0 %v61
    %83 = vmatpush.msra.mxu0 %v60
    %84 = vmatpush.msra.mxu0 %v59
    %85 = vmatpush.msra.mxu0 %v58
    %86 = vmatpush.msra.mxu0 %v57
    %87 = vmatpush.msra.mxu0 %v56
    %88 = vmatmul.f32.gmra.mxu0 %v70
    %v89 = vpop.f32.mrf.mxu0
    %v90 = vadd.f32 %v66, %v89
    %91 = vdwg.mxu0
    %vm92 = vcmask 64512
    %93 = vst.msk [vmem:[#allocation2] sm:$0xff] %vm92, %v90
    // Predicated region
    $region22: #{fc_l2_forward.1} parent=1 // pred_check
      _
    $region23: #{fc_l2_forward.1} parent=1 // pred_check_branch
      %95 = sbr.rel (0) target = $region25
    $region24: #{fc_l2_forward.1} parent=1 // pred_region
      %97 = vsyncadd [#allocation3], 0
      %s99 = sshll.u32 [#allocation2], 4
      %s100 = int_to_ptr.vmem [resolvable:$true] %s99
      %s101 = sshll.u32 %s5, 4
      %s102 = int_to_ptr.hbm [resolvable:$true] %s101
      %104 = dma.vmem_to_hbm [thread:$0]  %s100, 128, %s102, [#allocation3]
    $region25: #{fc_l2_forward.1} parent=1 // pred_fallthru
      _
    // Predicated region
    $region26: #{fc_l2_forward.1} parent=1 // pred_check
      _
    $region27: #{fc_l2_forward.1} parent=1 // pred_check_branch
      %106 = sbr.rel (0) target = $region29
    $region28: #{fc_l2_forward.1} parent=1 // pred_region
      %108 = dma.done [#allocation3], 128
    $region29: #{fc_l2_forward.1} parent=1 // pred_fallthru
      _
    %109 = vsyncpa [#allocation3], 1

</llo_original>
